<compile_context>
chip_gen: v7x
topology: tpu7x:2x2x1
jax: 0.10.0
libtpu: 0.0.40
codegen_flags: <defaults>
</compile_context>

<pallas_src>
import jax
import jax.numpy as jnp
from jax import lax
from jax.experimental import pallas as pl
from jax.experimental.pallas import tpu as pltpu


LANE = 128                      # lane width of the flattened slab
MAX_TILE_ROWS = 8192            # 8192 x 128 f32 = 4 MiB per input block
SUB_ROWS = 512                  # in-kernel streaming sub-slice
VMEM_LIMIT_BYTES = 40 * 1024 * 1024
_JNP_FALLBACK_ELEMS = 1024      # below this a fused XLA reduction wins
                                # (raise to ~1e5 in production)


def _cdiv(a: int, b: int) -> int:
    return -(-a // b)


def _round_up(x: int, m: int) -> int:
    return ((x + m - 1) // m) * m


def _num_reduction_shards() -> int:
    """2 on multi-TensorCore chips (v7x / v5p / v4), 1 on v5e / v6e."""
    try:
        kind = jax.devices()[0].device_kind.lower()
    except Exception:
        return 1
    if "lite" in kind:
        return 1
    if ("v7" in kind) or ("v5p" in kind) or ("v4" in kind):
        return 2
    return 1


def _reference_bce(y_pred, y):
    """Pure-jnp BCE (PyTorch semantics: log terms clamped at -100)."""
    log_p = jnp.maximum(jnp.log(y_pred), -100.0)
    log_1mp = jnp.maximum(jnp.log(1.0 - y_pred), -100.0)
    return jnp.mean(-(y * log_p + (1.0 - y) * log_1mp))


def _make_bce_kernel(steps: int, tile_rows: int, sub_rows: int,
                     binary_targets: bool):
    n_sub = tile_rows // sub_rows

    def kernel(n_ref, yp_ref, y_ref, out_ref, acc_ref):
        c = pl.program_id(0)   # reduction shard (TensorCore)
        i = pl.program_id(1)   # step within the shard

        @pl.when(i == 0)
        def _():
            acc_ref[...] = jnp.zeros_like(acc_ref)

        n_valid = n_ref[0]
        # Logical (unclamped) first row of this block; drives tail masking.
        block_row0 = (c * steps + i) * tile_rows

        # Hoisted out of the sub-slice loop (JAX does not CSE broadcasts).
        row_iota = lax.broadcasted_iota(jnp.int32, (sub_rows, LANE), 0)
        lane_iota = lax.broadcasted_iota(jnp.int32, (sub_rows, LANE), 1)

        def process(r0):
            yp = yp_ref[pl.ds(r0, sub_rows), :].astype(jnp.float32)
            y = y_ref[pl.ds(r0, sub_rows), :]
            # int32 global element index (valid for < 2**31 elements).
            idx = (block_row0 + r0 + row_iota) * LANE + lane_iota
            valid = idx < n_valid
            if binary_targets:
                # Hard 0/1 targets: pick the right probability, single log.
                p = jnp.where(y != 0, yp, 1.0 - yp)
                p = jnp.where(valid, p, 1.0)            # masked lanes -> log(1)=0
                nll = -jnp.maximum(jnp.log(p), -100.0)
            else:
                # General (soft-label) BCE, exact PyTorch semantics.
                yf = y.astype(jnp.float32)
                log_p = jnp.maximum(jnp.log(jnp.where(valid, yp, 1.0)), -100.0)
                log_1mp = jnp.maximum(
                    jnp.log(jnp.where(valid, 1.0 - yp, 1.0)), -100.0)
                nll = jnp.where(valid,
                                -(yf * log_p + (1.0 - yf) * log_1mp),
                                0.0)
            # Fold into the vreg-shaped accumulator.
            if sub_rows % 8 == 0:
                # Pure VPU adds: same (sublane, lane) positions across vregs.
                acc_ref[...] += nll.reshape(-1, 8, LANE).sum(axis=0)
            else:
                # Only hit for a single small odd-shaped block.
                acc_ref[0:1, :] += nll.sum(axis=0, keepdims=True)

        if n_sub == 1:
            process(0)
        else:
            def loop_body(j, carry):
                process(pl.multiple_of(j * sub_rows, sub_rows))
                return carry
            lax.fori_loop(0, n_sub, loop_body, 0)

        @pl.when(i == pl.num_programs(1) - 1)
        def _():
            out_ref[0, 0] = jnp.sum(acc_ref[...])

    return kernel


def pcsr_loss(y_pred: jax.Array, y: jax.Array, *,
              binary_targets: bool = False) -> jax.Array:
    """Mean binary cross entropy (== nn.functional.binary_cross_entropy).

    Set binary_targets=True only when `y` is guaranteed to hold hard 0/1
    labels; it enables a single-log fast path that is NOT exact for soft labels.
    """
    assert y_pred.shape == y.shape
    n = y_pred.size

    if n < _JNP_FALLBACK_ELEMS:
        # Launch + per-step overhead dominates; use a fused XLA reduction.
        return _reference_bce(y_pred.astype(jnp.float32), y.astype(jnp.float32))

    yp_flat = y_pred.reshape(-1)
    y_flat = y.reshape(-1)

    rows = _cdiv(n, LANE)
    rem = rows * LANE - n
    if rem:
        # TODO(synk): only when n % 128 != 0 — this pad still copies the inputs
        # once; the tile-level tail is otherwise masked in-kernel with no pad.
        yp_flat = jnp.pad(yp_flat, (0, rem), constant_values=1.0)
        y_flat = jnp.pad(y_flat, (0, rem), constant_values=1.0)

    yp2 = yp_flat.reshape(rows, LANE)
    y2 = y_flat.reshape(rows, LANE)

    num_shards = _num_reduction_shards()
    if num_shards > 1 and rows < 2 * MAX_TILE_ROWS:
        num_shards = 1  # not enough rows to keep both cores on full tiles

    per_shard_rows = _cdiv(rows, num_shards)
    if per_shard_rows >= MAX_TILE_ROWS:
        tile_rows = MAX_TILE_ROWS          # multiple of SUB_ROWS
        sub_rows = SUB_ROWS
    else:
        # Single block covering the whole (small/medium) slab: block row dim
        # equals the full array dim, so no alignment/padding constraints.
        tile_rows = rows
        sub_rows = rows
        for s in (512, 256, 128, 64, 32):
            if rows % s == 0:
                sub_rows = s
                break

    steps = _cdiv(rows, num_shards * tile_rows)
    last_block = _cdiv(rows, tile_rows) - 1

    # Clamp the block index so blocks that fall entirely past the end of the
    # array (possible with 2-way sharding) re-read the last valid block; their
    # contribution is zeroed by the in-kernel tail mask.
    def in_index_map(c, i, n_ref):
        del n_ref
        return (jnp.minimum(c * steps + i, last_block), 0)

    kernel = _make_bce_kernel(steps, tile_rows, sub_rows, binary_targets)

    cost = pl.CostEstimate(
        flops=8 * n,
        transcendentals=(n if binary_targets else 2 * n),
        bytes_accessed=n * (y_pred.dtype.itemsize + y.dtype.itemsize)
        + 4 * (num_shards + 1),
    )

    partial_sums = pl.pallas_call(
        kernel,
        out_shape=jax.ShapeDtypeStruct((num_shards, 1), jnp.float32),
        grid_spec=pltpu.PrefetchScalarGridSpec(
            num_scalar_prefetch=1,
            grid=(num_shards, steps),
            in_specs=[
                pl.BlockSpec((tile_rows, LANE), in_index_map),
                pl.BlockSpec((tile_rows, LANE), in_index_map),
            ],
            out_specs=pl.BlockSpec(
                (1, 1), lambda c, i, n_ref: (c, 0),
                memory_space=pltpu.MemorySpace.SMEM,
            ),
            scratch_shapes=[pltpu.VMEM((8, LANE), jnp.float32)],
        ),
        compiler_params=pltpu.CompilerParams(
            dimension_semantics=("parallel", "arbitrary"),
            vmem_limit_bytes=VMEM_LIMIT_BYTES,
        ),
        cost_estimate=cost,
    )(jnp.array([n], dtype=jnp.int32), yp2, y2)

    return jnp.sum(partial_sums) / jnp.float32(n)


if __name__ == "__main__":
    key = jax.random.PRNGKey(0)
    k1, k2, k3 = jax.random.split(key, 3)

    shape = (2, 4, 16, 16)  # NCHW probabilities / targets
    y_pred = jax.random.uniform(k1, shape, dtype=jnp.float32,
                                minval=1e-4, maxval=1.0 - 1e-4)

    # Hard 0/1 targets, shipped as bf16 (exact 0/1, halves their HBM traffic).
    y_bin = (jax.random.uniform(k2, shape, dtype=jnp.float32) > 0.5).astype(
        jnp.bfloat16)
    loss_bin = pcsr_loss(y_pred, y_bin, binary_targets=True)
    jax.block_until_ready(loss_bin)
    ref_bin = _reference_bce(y_pred, y_bin.astype(jnp.float32))
    assert jnp.allclose(loss_bin, ref_bin, rtol=1e-4, atol=1e-6), (loss_bin, ref_bin)

    # Soft-label path (exact PyTorch semantics, two-log formulation).
    y_soft = jax.random.uniform(k3, shape, dtype=jnp.float32)
    loss_soft = pcsr_loss(y_pred, y_soft)
    jax.block_until_ready(loss_soft)
    ref_soft = _reference_bce(y_pred, y_soft)
    assert jnp.allclose(loss_soft, ref_soft, rtol=1e-4, atol=1e-6), (loss_soft, ref_soft)

    print("KERNEL_OK")
</pallas_src>

<mosaic_0001>
module attributes {stable_mosaic.version = 11 : i64} {
  func.func @kernel(%arg0: i32, %arg1: i32, %arg2: memref<1xi32, #tpu.memory_space<smem>>, %arg3: memref<16x128xf32, #tpu.memory_space<vmem>>, %arg4: memref<16x128xbf16, #tpu.memory_space<vmem>>, %arg5: memref<1x1xf32, #tpu.memory_space<smem>>, %arg6: memref<8x128xf32, #tpu.memory_space<vmem>>) attributes {dimension_semantics = [#tpu.dimension_semantics<parallel>, #tpu.dimension_semantics<arbitrary>], iteration_bounds = array<i64: 1, 1>, scalar_prefetch = 1 : i64, scratch_operands = 1 : i64, tpu.core_type = #tpu.core_type<tc>, window_params = [{transform_indices = @transform_0, window_bounds = array<i64: 16, 128>}, {transform_indices = @transform_1, window_bounds = array<i64: 16, 128>}, {transform_indices = @transform_2, window_bounds = array<i64: 1, 1>}]} {
    %c0_i32 = arith.constant 0 : i32
    %0 = arith.cmpi eq, %arg1, %c0_i32 : i32
    %1 = arith.extui %0 : i1 to i32
    %c0_i32_0 = arith.constant 0 : i32
    %2 = arith.cmpi ne, %1, %c0_i32_0 : i32
    scf.if %2 {
      %cst_17 = arith.constant 0.000000e+00 : f32
      %39 = vector.broadcast %cst_17 : f32 to vector<8x128xf32>
      %c0_18 = arith.constant 0 : index
      %c0_19 = arith.constant 0 : index
      %40 = vector.load %arg6[%c0_18, %c0_19] : memref<8x128xf32, #tpu.memory_space<vmem>>, vector<8x128xf32>
      tpu.vector_store %arg6[%c0_18, %c0_19], %39 {strides = array<i32>} : memref<8x128xf32, #tpu.memory_space<vmem>>, vector<8x128xf32>,
    } else {
    }
    %c0 = arith.constant 0 : index
    %3 = memref.load %arg2[%c0] : memref<1xi32, #tpu.memory_space<smem>>
    %c1_i32 = arith.constant 1 : i32
    %4 = arith.muli %arg0, %c1_i32 : i32
    %5 = arith.addi %4, %arg1 : i32
    %c16_i32 = arith.constant 16 : i32
    %6 = arith.muli %5, %c16_i32 : i32
    %7 = tpu.iota {dimensions = array<i32: 0>} : vector<16x128xi32>
    %8 = tpu.iota {dimensions = array<i32: 1>} : vector<16x128xi32>
    %c0_1 = arith.constant 0 : index
    %c0_2 = arith.constant 0 : index
    %9 = vector.load %arg3[%c0_1, %c0_2] : memref<16x128xf32, #tpu.memory_space<vmem>>, vector<16x128xf32>
    %c0_3 = arith.constant 0 : index
    %c0_4 = arith.constant 0 : index
    %10 = vector.load %arg4[%c0_3, %c0_4] : memref<16x128xbf16, #tpu.memory_space<vmem>>, vector<16x128xbf16>
    %c0_i32_5 = arith.constant 0 : i32
    %11 = arith.addi %6, %c0_i32_5 : i32
    %12 = vector.broadcast %11 : i32 to vector<16x128xi32>
    %13 = arith.addi %12, %7 : vector<16x128xi32>
    %c128_i32 = arith.constant 128 : i32
    %14 = vector.broadcast %c128_i32 : i32 to vector<16x128xi32>
    %15 = arith.muli %13, %14 : vector<16x128xi32>
    %16 = arith.addi %15, %8 : vector<16x128xi32>
    %17 = vector.broadcast %3 : i32 to vector<16x128xi32>
    %18 = arith.cmpi slt, %16, %17 : vector<16x128xi32>
    %cst = arith.constant 0.000000e+00 : bf16
    %19 = vector.broadcast %cst : bf16 to vector<16x128xbf16>
    %20 = arith.cmpf one, %10, %19 : vector<16x128xbf16>
    %cst_6 = arith.constant 1.000000e+00 : f32
    %21 = vector.broadcast %cst_6 : f32 to vector<16x128xf32>
    %22 = arith.subf %21, %9 : vector<16x128xf32>
    %23 = arith.select %20, %9, %22 : vector<16x128xi1>, vector<16x128xf32>
    %cst_7 = arith.constant 1.000000e+00 : f32
    %24 = vector.broadcast %cst_7 : f32 to vector<16x128xf32>
    %25 = arith.select %18, %23, %24 : vector<16x128xi1>, vector<16x128xf32>
    %26 = math.log %25 : vector<16x128xf32>
    %cst_8 = arith.constant -1.000000e+02 : f32
    %27 = vector.broadcast %cst_8 : f32 to vector<16x128xf32>
    %28 = arith.maximumf %26, %27 : vector<16x128xf32>
    %cst_9 = arith.constant 0.000000e+00 : f32
    %29 = vector.broadcast %cst_9 : f32 to vector<16x128xf32>
    %30 = arith.subf %29, %28 : vector<16x128xf32>
    %c0_10 = arith.constant 0 : index
    %c0_11 = arith.constant 0 : index
    %31 = vector.load %arg6[%c0_10, %c0_11] : memref<8x128xf32, #tpu.memory_space<vmem>>, vector<8x128xf32>
    %32 = vector.shape_cast %30 : vector<16x128xf32> to vector<2x8x128xf32>
    %cst_12 = arith.constant dense<0.000000e+00> : vector<8x128xf32>
    %33 = vector.multi_reduction <add>, %32, %cst_12 [0] : vector<2x8x128xf32> to vector<8x128xf32>
    %34 = arith.addf %31, %33 : vector<8x128xf32>
    %c0_13 = arith.constant 0 : index
    %c0_14 = arith.constant 0 : index
    %35 = vector.load %arg6[%c0_13, %c0_14] : memref<8x128xf32, #tpu.memory_space<vmem>>, vector<8x128xf32>
    tpu.vector_store %arg6[%c0_13, %c0_14], %34 {strides = array<i32>} : memref<8x128xf32, #tpu.memory_space<vmem>>, vector<8x128xf32>,
    %c0_i32_15 = arith.constant 0 : i32
    %36 = arith.cmpi eq, %arg1, %c0_i32_15 : i32
    %37 = arith.extui %36 : i1 to i32
    %c0_i32_16 = arith.constant 0 : i32
    %38 = arith.cmpi ne, %37, %c0_i32_16 : i32
    scf.if %38 {
      %c0_17 = arith.constant 0 : index
      %c0_18 = arith.constant 0 : index
      %39 = vector.load %arg6[%c0_17, %c0_18] : memref<8x128xf32, #tpu.memory_space<vmem>>, vector<8x128xf32>
      %40 = vector.shape_cast %39 : vector<8x128xf32> to vector<1x8x128xf32>
      %cst_19 = arith.constant dense<0.000000e+00> : vector<1xf32>
      %41 = vector.multi_reduction <add>, %40, %cst_19 [1, 2] : vector<1x8x128xf32> to vector<1xf32>
      %42 = vector.shape_cast %41 : vector<1xf32> to vector<1x1x1xf32>
      %43 = vector.extract %42[0, 0, 0] : f32 from vector<1x1x1xf32>
      %c0_20 = arith.constant 0 : index
      %c0_21 = arith.constant 0 : index
      %44 = memref.load %arg5[%c0_20, %c0_21] : memref<1x1xf32, #tpu.memory_space<smem>>
      memref.store %43, %arg5[%c0_20, %c0_21] : memref<1x1xf32, #tpu.memory_space<smem>>
    } else {
    }
    return
  }
  func.func @transform_0(%arg0: i32, %arg1: i32, %arg2: memref<1xi32, #tpu.memory_space<smem>>) -> (i32, i32) {
    %c1_i32 = arith.constant 1 : i32
    %0 = arith.muli %arg0, %c1_i32 : i32
    %1 = arith.addi %0, %arg1 : i32
    %c0_i32 = arith.constant 0 : i32
    %2 = arith.minsi %1, %c0_i32 : i32
    %c0_i32_0 = arith.constant 0 : i32
    %c0_i32_1 = arith.constant 0 : i32
    return %2, %c0_i32_0 : i32, i32
  }
  func.func @transform_1(%arg0: i32, %arg1: i32, %arg2: memref<1xi32, #tpu.memory_space<smem>>) -> (i32, i32) {
    %c1_i32 = arith.constant 1 : i32
    %0 = arith.muli %arg0, %c1_i32 : i32
    %1 = arith.addi %0, %arg1 : i32
    %c0_i32 = arith.constant 0 : i32
    %2 = arith.minsi %1, %c0_i32 : i32
    %c0_i32_0 = arith.constant 0 : i32
    %c0_i32_1 = arith.constant 0 : i32
    return %2, %c0_i32_0 : i32, i32
  }
  func.func @transform_2(%arg0: i32, %arg1: i32, %arg2: memref<1xi32, #tpu.memory_space<smem>>) -> (i32, i32) {
    %c0_i32 = arith.constant 0 : i32
    %c0_i32_0 = arith.constant 0 : i32
    return %arg0, %c0_i32 : i32, i32
  }
}

</mosaic_0001>

<llo_original>
// kernel: tpu_custom_call.1
$region0: #{tpu_custom_call.1}
  #allocation0 [shape = 'u32[]', space=smem, size = 0x4, offset = 0x4, fixed_abs, tag = 'smem constant byte address 0x4 - core index']
  #allocation1 [shape = 'u32[144,128]{1,0:T(1,128)}', space=vmem, size = 0x12000, scoped, tag = 'internal scratch']
  #allocation2 [shape = 'f32[8,128]{1,0:T(8,128)}', space=vmem, size = 0x1000, scoped, tag = 'scratch operand']
  #allocation3 [shape = 's32[1]{0}', space=sflag, size = 0x4, scoped, tag = 'scoped memory for tpu_custom_call.1']
  #allocation4 [shape = 's32[1]{0:T(128)S(6)}', space=smem, size = 0x200, scoped, tag = 'prefetched SMEM operand 0']
  %s0 = inlined_call_operand.<no memory space> [shape: s32[1], index: 0, kind: input, shape index: {}]
  %s1 = inlined_call_operand.hbm [shape: f32[16,128], index: 1, kind: input, shape index: {}]
  %s2 = inlined_call_operand.hbm [shape: bf16[16,128], index: 2, kind: input, shape index: {}]
  %s3 = inlined_call_operand.hbm [shape: f32[1,1], index: 3, kind: output, shape index: {}]
  %s4 = sld [smem:[#allocation0]]
  $region34: #{tpu_custom_call.1} parent=0
    _
  %s6 = ssub.s32 1, %s4
  %s7 = scalar_select 0, %s6, %s4
  %8 = sst [smem:[#allocation4]] %s0
  $region1: #{tpu_custom_call.1} parent=0
    #allocation5 [shape = 'u8[8192]{0}', space=vmem, size = 0x2000, scoped, tag = 'input window, operand 1, single buffered']
    #allocation6 [shape = 's32[1]{0}', space=sflag, size = 0x4, scoped, tag = 'scoped memory for tpu_custom_call.1']
    #allocation7 [shape = 's32[1]{0}', space=sflag, size = 0x4, scoped, tag = 'scoped memory for tpu_custom_call.1']
    #allocation8 [shape = 'u8[4096]{0}', space=vmem, size = 0x1000, scoped, tag = 'input window, operand 2, single buffered']
    #allocation9 [shape = 's32[1]{0}', space=sflag, size = 0x4, scoped, tag = 'scoped memory for tpu_custom_call.1']
    #allocation10 [shape = 'u8[512]{0}', space=smem, size = 0x200, scoped, tag = 'output window, operand 0, single buffered']
    %9 = vsyncpa [#allocation6], 0
    %10 = vsyncpa [#allocation9], 0
    %11 = vsyncpa [#allocation7], 0
    // Predicated region
    $region2: #{tpu_custom_call.1} parent=1 // pred_check
      _
    $region3: #{tpu_custom_call.1} parent=1 // pred_check_branch
      %13 = sbr.rel (0) target = $region5
    $region4: #{tpu_custom_call.1} parent=1 // pred_region
      %s14 = sadd.s32 0, 0
      %p15 = scmp.lt.s32.totalorder %s14, 0
      %s16 = scalar_select %p15, %s14, 0
      %s17 = smul.u32 2, %s16
      %s19 = ssub.s32 256, 256
      %20 = vsyncadd [#allocation6], %s19
      %s21 = smul.addr %s17, 128
      %s22 = scalar_lea.hbm %s1, %s21
      %s23 = sshll.u32 [#allocation5], 4
      %s24 = int_to_ptr.vmem [resolvable:$true] %s23
      %29 = dma.hbm_to_vmem [thread:$0]  %s22, 256, %s24, [#allocation6], 128, 128, 8
    $region5: #{tpu_custom_call.1} parent=1 // pred_fallthru
      _
    // Predicated region
    $region6: #{tpu_custom_call.1} parent=1 // pred_check
      _
    $region7: #{tpu_custom_call.1} parent=1 // pred_check_branch
      %31 = sbr.rel (0) target = $region9
    $region8: #{tpu_custom_call.1} parent=1 // pred_region
      %s32 = sadd.s32 0, 0
      %p33 = scmp.lt.s32.totalorder %s32, 0
      %s34 = scalar_select %p33, %s32, 0
      %s35 = smul.u32 2, %s34
      %s37 = ssub.s32 128, 128
      %38 = vsyncadd [#allocation9], %s37
      %s39 = smul.addr %s35, 64
      %s40 = scalar_lea.hbm %s2, %s39
      %s41 = sshll.u32 [#allocation8], 4
      %s42 = int_to_ptr.vmem [resolvable:$true] %s41
      %47 = dma.hbm_to_vmem [thread:$0]  %s40, 128, %s42, [#allocation9], 64, 64, 4
    $region9: #{tpu_custom_call.1} parent=1 // pred_fallthru
      _
    // Predicated region
    $region10: #{tpu_custom_call.1} parent=1 // pred_check
      _
    $region11: #{tpu_custom_call.1} parent=1 // pred_check_branch
      %49 = sbr.rel (0) target = $region13
    $region12: #{tpu_custom_call.1} parent=1 // pred_region
      %50 = dma.done [#allocation6], 256
    $region13: #{tpu_custom_call.1} parent=1 // pred_fallthru
      _
    // Predicated region
    $region14: #{tpu_custom_call.1} parent=1 // pred_check
      _
    $region15: #{tpu_custom_call.1} parent=1 // pred_check_branch
      %52 = sbr.rel (0) target = $region17
    $region16: #{tpu_custom_call.1} parent=1 // pred_region
      %53 = dma.done [#allocation9], 128
    $region17: #{tpu_custom_call.1} parent=1 // pred_fallthru
      _
    %s54 = sadd.s32 0, 0
    %p55 = scmp.lt.s32.totalorder %s54, 0
    %s56 = scalar_select %p55, %s54, 0
    %s57 = smul.u32 2, %s56
    %s58 = sadd.s32 0, 0
    %p59 = scmp.lt.s32.totalorder %s58, 0
    %s60 = scalar_select %p59, %s58, 0
    %s61 = smul.u32 2, %s60
    %p65 = scmp.eq.s32.totalorder 0, 0
    // Predicated region
    $region18: #{tpu_custom_call.1} parent=1 // pred_check
      %p66 = pneg %p65
    $region19: #{tpu_custom_call.1} parent=1 // pred_check_branch
      %68 = sbr.rel (%p66) target = $region21
    $region20: #{tpu_custom_call.1} parent=1 // pred_region
      %69 = vst [vmem:[#allocation2] sm:$0xff] 0.0
    $region21: #{tpu_custom_call.1} parent=1 // pred_fallthru
      _
    %s70 = sld [smem:[#allocation4]]
    %s71 = sadd.s32 0, 0
    %s72 = smul.u32 %s71, 16
    %v73 = vlaneseq
    %v74 = vshrl.u32 %v73, 7
    %v75 = vadd.s32 %v74, 8
    %v76 = vlaneseq
    %v77 = vand.u32 %v76, 127
    %v78 = vld [vmem:[#allocation5] sm:$0xff]
    %v79 = vld [vmem:[#allocation5 + $0x8] sm:$0xff]
    %v80 = vld [vmem:[#allocation8] sm:$0xf]
    %v81 = vld [vmem:[#allocation8 + $0x4] sm:$0xf]
    %v82 = vstv %s72
    %v83 = vadd.s32 %v82, %v74
    %v84 = vadd.s32 %v82, %v75
    %v85 = vmul.u32 %v83, 128
    %v86 = vmul.u32 %v84, 128
    %v87 = vadd.s32 %v85, %v77
    %v88 = vadd.s32 %v86, %v77
    %v89 = vstv %s70
    %vm90 = vcmp.lt.s32.totalorder %v87, %v89
    %vm91 = vcmp.lt.s32.totalorder %v88, %v89
    %vm92 = vcmp.ne.bf16.partialorder %v80, 0
    %vm93 = vcmp.ne.bf16.partialorder %v81, 0
    %v94 = vsub.f32 1.0, %v78
    %v95 = vsub.f32 1.0, %v79
    %v96 = vsel %vm92, 65537, 0
    %v97 = vsel %vm93, 65537, 0
    %v98 = vunpack.c.l.b16 %v96
    %v99 = vunpack.c.l.b16 %v97
    %vm100 = vcmp.ne.s32.totalorder %v98, 0
    %vm101 = vcmp.ne.s32.totalorder %v99, 0
    %v102 = vsel %vm100, %v78, %v94
    %v103 = vsel %vm101, %v79, %v95
    %v104 = vsel %vm90, %v102, 1.0
    %v105 = vsel %vm91, %v103, 1.0
    %v106 = vlog2.pop %v104
    %v107 = vmul.f32 %v106, 0.6931472
    %v108 = vlog2.pop %v105
    %v109 = vmul.f32 %v108, 0.6931472
    %v110 = vmax.f32 %v107, -100.0
    %v111 = vmax.f32 %v109, -100.0
    %v112 = vsub.f32 0.0, %v110
    %v113 = vsub.f32 0.0, %v111
    %v114 = vld [vmem:[#allocation2] sm:$0xff]
    %v115 = vadd.f32 %v112, %v113
    %v116 = vadd.f32 %v114, %v115
    %117 = vst [vmem:[#allocation2] sm:$0xff] %v116
    // Predicated region
    $region22: #{tpu_custom_call.1} parent=1 // pred_check
      %p118 = pneg %p65
    $region23: #{tpu_custom_call.1} parent=1 // pred_check_branch
      %120 = sbr.rel (%p118) target = $region25
    $region24: #{tpu_custom_call.1} parent=1 // pred_region
      %v121 = vld [vmem:[#allocation2] sm:$0xff]
      %122 = vadd.xlane.f32.xlu0 %v121
      %v123 = vpop.xlane.xlu0 %122
      %v124 = vrot.slane %v123, 4
      %v125 = vadd.f32 %v123, %v124
      %v126 = vrot.slane %v125, 2
      %v127 = vadd.f32 %v125, %v126
      %v128 = vrot.slane %v127, 1
      %v129 = vadd.f32 %v127, %v128
      %s130 = vtos %v129
      %s131 = scalar_lea.smem [#allocation10], 0
      %132 = sst [smem:[%s131]] %s130
    $region25: #{tpu_custom_call.1} parent=1 // pred_fallthru
      _
    // Predicated region
    $region26: #{tpu_custom_call.1} parent=1 // pred_check
      _
    $region27: #{tpu_custom_call.1} parent=1 // pred_check_branch
      %134 = sbr.rel (0) target = $region29
    $region28: #{tpu_custom_call.1} parent=1 // pred_region
      %s136 = ssub.s32 16, 16
      %137 = vsyncadd [#allocation7], %s136
      %140 = dma.smem_to_hbm [#allocation10], 16, %s3, [#allocation7]
    $region29: #{tpu_custom_call.1} parent=1 // pred_fallthru
      _
    // Predicated region
    $region30: #{tpu_custom_call.1} parent=1 // pred_check
      _
    $region31: #{tpu_custom_call.1} parent=1 // pred_check_branch
      %142 = sbr.rel (0) target = $region33
    $region32: #{tpu_custom_call.1} parent=1 // pred_region
      %143 = dma.done [#allocation7], 16
    $region33: #{tpu_custom_call.1} parent=1 // pred_fallthru
      _
    %144 = sfence
    %145 = vsyncpa [#allocation6], 1
    %146 = vsyncpa [#allocation9], 1
    %147 = vsyncpa [#allocation7], 1

</llo_original>
